<compile_context>
chip_gen: v5e
topology: v5e:2x2
jax: 0.10.0
libtpu: 0.0.40
codegen_flags: <defaults>
</compile_context>

<pallas_src>
from functools import lru_cache, partial

import numpy as np
import jax
import jax.numpy as jnp
from jax.experimental import pallas as pl
from jax.experimental.pallas import tpu as pltpu


# ---------------------------------------------------------------------------
# Interpolation-matrix construction (host-side, cached, exact f64 -> f32)
# ---------------------------------------------------------------------------
def _bilinear_matrix_np(n_in: int, n_out: int) -> np.ndarray:
    """1-D bilinear interpolation matrix, PyTorch align_corners=False semantics."""
    scale = n_in / n_out
    i = np.arange(n_out, dtype=np.float64)
    src = np.maximum((i + 0.5) * scale - 0.5, 0.0)
    i0 = np.minimum(np.floor(src).astype(np.int64), n_in - 1)
    i1 = np.minimum(i0 + 1, n_in - 1)
    lam1 = src - i0.astype(np.float64)
    lam0 = 1.0 - lam1
    a = np.zeros((n_out, n_in), np.float64)
    rows = np.arange(n_out)
    np.add.at(a, (rows, i0), lam0)
    np.add.at(a, (rows, i1), lam1)
    return a


@lru_cache(maxsize=None)
def _fused_interp_matrix(H: int, W: int, Hs: int, Ws: int):
    """(H*W, Hs*Ws) matrix implementing circular-pad(H,1) -> bilinear resize to
    (Hs+2, Ws) -> crop rows 1:-1, applied on the right of a (*, H*W) operand."""
    Hp = H + 2
    # H-direction matrix on the padded input, crop 1:-1 folded in: (Hs, Hp)
    ah = _bilinear_matrix_np(Hp, Hs + 2)[1:-1, :]
    # Fold the circular pad: padded row 0 == x[H-1], padded row H+1 == x[0]
    ah_fold = ah[:, 1:H + 1].copy()
    ah_fold[:, H - 1] += ah[:, 0]
    ah_fold[:, 0] += ah[:, Hp - 1]
    # W-direction matrix: (Ws, W)
    aw = _bilinear_matrix_np(W, Ws)
    # MT[h*W + w, hs*Ws + ws] = ah_fold[hs, h] * aw[ws, w]
    mt = np.kron(ah_fold.T, aw.T)                         # (H*W, Hs*Ws)
    return jnp.asarray(mt, dtype=jnp.float32)


def _num_parallel_splits(hsws: int) -> int:
    """v7x has 2 TensorCores/chip: keep 2 lane-dense parallel steps. v5e/v6e have
    1 TC/chip: a single grid step avoids ~0.35us/step pipeline overhead on a
    kernel whose total compute is well under a microsecond."""
    try:
        kind = jax.devices()[0].device_kind.lower()
    except Exception:
        kind = ""
    n = 2 if ("v7" in kind or "7x" in kind) else 1
    if n > 1 and (hsws % (n * 128) != 0):
        n = 1                                   # keep every store a multiple of 128 lanes
    return n


# ---------------------------------------------------------------------------
# Kernel
# ---------------------------------------------------------------------------
def _ring_kernel(x_ref, wblk_ref, mt_ref, shift_ref, skip_ref, out_ref):
    # x_ref    : (B*Cin,  H*W)        grid-invariant
    # wblk_ref : (B*Cout, B*Cin)      block-diag conv weight (bn scale folded), invariant
    # mt_ref   : (H*W, tile_n)        fused pad+interp+crop slice (lane-dense)
    # shift_ref: (B*Cout, 1)          bn shift per output row, invariant
    # skip_ref : (B*Cout, tile_n)
    # out_ref  : (B*Cout, tile_n)
    #
    # 1x1 conv (bn scale folded) for ALL batches as one MXU matmul at LOW res.
    y_lo = jnp.dot(wblk_ref[...], x_ref[...],
                   preferred_element_type=jnp.float32)          # (B*Cout, H*W)
    # Fused circular-pad + bilinear upsample + crop as one lane-dense matmul.
    y_hi = jnp.dot(y_lo, mt_ref[...],
                   preferred_element_type=jnp.float32)          # (B*Cout, tile_n)
    # BN shift + residual add, one broadcasted VPU pass, unmasked lane-dense store.
    out_ref[...] = (y_hi + shift_ref[...] + skip_ref[...]).astype(out_ref.dtype)


@partial(jax.jit, static_argnames=("n_split",))
def _ring_upsampling_add_impl(x, x_skip, conv_w, bn_scale, bn_shift, mt, *, n_split):
    B, Cin, H, W = x.shape
    _, Cout, Hs, Ws = x_skip.shape
    HW, HsWs = H * W, Hs * Ws
    tile_n = HsWs // n_split

    x_flat = jnp.reshape(x, (B * Cin, HW)).astype(jnp.float32)           # row = b*Cin + c
    skip_flat = jnp.reshape(x_skip, (B * Cout, HsWs)).astype(jnp.float32)  # row = b*Cout + o

    # Fold BN scale into the conv weight (exact: conv and resize are linear),
    # and fold the batch dim into M via a block-diagonal weight.
    wc_scaled = (bn_scale[:, None] * conv_w).astype(jnp.float32)         # (Cout, Cin)
    w_blk = jnp.kron(jnp.eye(B, dtype=jnp.float32), wc_scaled)           # (B*Cout, B*Cin)
    shift = jnp.reshape(jnp.tile(bn_shift.astype(jnp.float32), B), (B * Cout, 1))

    out_flat = pl.pallas_call(
        _ring_kernel,
        out_shape=jax.ShapeDtypeStruct((B * Cout, HsWs), jnp.float32),
        grid_spec=pltpu.PrefetchScalarGridSpec(
            num_scalar_prefetch=0,
            grid=(n_split,),
            in_specs=[
                pl.BlockSpec((B * Cin, HW), lambda j: (0, 0)),        # x (invariant)
                pl.BlockSpec((B * Cout, B * Cin), lambda j: (0, 0)),  # conv weight (invariant)
                pl.BlockSpec((HW, tile_n), lambda j: (0, j)),         # fused interp slice
                pl.BlockSpec((B * Cout, 1), lambda j: (0, 0)),        # bn shift (invariant)
                pl.BlockSpec((B * Cout, tile_n), lambda j: (0, j)),   # skip
            ],
            out_specs=pl.BlockSpec((B * Cout, tile_n), lambda j: (0, j)),
        ),
        compiler_params=pltpu.CompilerParams(
            dimension_semantics=("parallel",)),
    )(x_flat, w_blk, mt, shift, skip_flat)

    return jnp.reshape(out_flat, (B, Cout, Hs, Ws))


def ring_upsampling_add(x, x_skip, conv_w, bn_scale, bn_shift):
    B, Cin, H, W = x.shape
    Bs, Cout, Hs, Ws = x_skip.shape
    assert Bs == B
    assert (Hs * Ws) % 128 == 0, "output spatial size must stay lane-dense (multiple of 128)"
    mt = _fused_interp_matrix(H, W, Hs, Ws)               # cached, zero runtime cost
    n_split = _num_parallel_splits(Hs * Ws)
    return _ring_upsampling_add_impl(x, x_skip, conv_w, bn_scale, bn_shift, mt,
                                     n_split=n_split)


# ---------------------------------------------------------------------------
# Pure-JAX reference with the ORIGINAL op order (pad -> interp -> crop -> conv
# -> BN -> add), for self-check.
# ---------------------------------------------------------------------------
def ring_upsampling_add_ref(x, x_skip, conv_w, bn_scale, bn_shift):
    B, Cin, H, W = x.shape
    _, Cout, Hs, Ws = x_skip.shape
    x_pad = jnp.concatenate([x[:, :, -1:, :], x, x[:, :, :1, :]], axis=2)
    ah = jnp.asarray(_bilinear_matrix_np(H + 2, Hs + 2)[1:-1, :], jnp.float32)
    aw = jnp.asarray(_bilinear_matrix_np(W, Ws), jnp.float32)
    t = jnp.einsum('hi,bciw->bchw', ah, x_pad)
    t = jnp.einsum('bchw,vw->bchv', t, aw)
    y = jnp.einsum('oc,bchw->bohw', conv_w, t)
    y = y * bn_scale[None, :, None, None] + bn_shift[None, :, None, None]
    return y + x_skip


if __name__ == "__main__":
    key = jax.random.PRNGKey(0)
    kx, ks, kw, kg, kb, km, kv = jax.random.split(key, 7)

    B, Cin, Cout = 2, 8, 8
    H, W = 8, 16
    scale_factor = 2
    Hs, Ws = H * scale_factor, W * scale_factor

    x = jax.random.normal(kx, (B, Cin, H, W), jnp.float32)
    x_skip = jax.random.normal(ks, (B, Cout, Hs, Ws), jnp.float32)

    # Deterministic synthetic parameters (nn.Conv2d 1x1 no-bias + nn.BatchNorm2d)
    conv_w = 0.1 * jax.random.normal(kw, (Cout, Cin), jnp.float32)
    gamma = 1.0 + 0.1 * jax.random.normal(kg, (Cout,), jnp.float32)
    beta = 0.1 * jax.random.normal(kb, (Cout,), jnp.float32)
    running_mean = 0.1 * jax.random.normal(km, (Cout,), jnp.float32)
    running_var = 1.0 + 0.1 * jax.random.uniform(kv, (Cout,), jnp.float32)
    eps = 1e-5
    # TODO(synk): BatchNorm is implemented in inference mode (running stats folded
    # into per-channel scale/shift); training-mode batch statistics are not
    # computed in-kernel.
    bn_scale = gamma / jnp.sqrt(running_var + eps)
    bn_shift = beta - running_mean * bn_scale

    out = ring_upsampling_add(x, x_skip, conv_w, bn_scale, bn_shift)
    out = jax.block_until_ready(out)

    ref = ring_upsampling_add_ref(x, x_skip, conv_w, bn_scale, bn_shift)
    assert out.shape == (B, Cout, Hs, Ws)
    max_err = float(jnp.max(jnp.abs(out - ref)))
    assert max_err < 1e-3, f"mismatch vs reference: {max_err}"
    print("KERNEL_OK")
</pallas_src>

<mosaic_0001>
module attributes {stable_mosaic.version = 11 : i64} {
  func.func @_ring_kernel(%arg0: i32, %arg1: memref<16x128xf32, #tpu.memory_space<vmem>>, %arg2: memref<16x16xf32, #tpu.memory_space<vmem>>, %arg3: memref<128x512xf32, #tpu.memory_space<vmem>>, %arg4: memref<16x1xf32, #tpu.memory_space<vmem>>, %arg5: memref<16x512xf32, #tpu.memory_space<vmem>>, %arg6: memref<16x512xf32, #tpu.memory_space<vmem>>) attributes {dimension_semantics = [#tpu.dimension_semantics<parallel>], iteration_bounds = array<i64: 1>, scalar_prefetch = 0 : i64, scratch_operands = 0 : i64, tpu.core_type = #tpu.core_type<tc>, window_params = [{pipeline_mode = #tpu.pipeline_mode<synchronous>, transform_indices = @transform_0, window_bounds = array<i64: 16, 128>}, {pipeline_mode = #tpu.pipeline_mode<synchronous>, transform_indices = @transform_1, window_bounds = array<i64: 16, 16>}, {transform_indices = @transform_2, window_bounds = array<i64: 128, 512>}, {pipeline_mode = #tpu.pipeline_mode<synchronous>, transform_indices = @transform_3, window_bounds = array<i64: 16, 1>}, {transform_indices = @transform_4, window_bounds = array<i64: 16, 512>}, {transform_indices = @transform_5, window_bounds = array<i64: 16, 512>}]} {
    %c0 = arith.constant 0 : index
    %c0_0 = arith.constant 0 : index
    %0 = vector.load %arg2[%c0, %c0_0] : memref<16x16xf32, #tpu.memory_space<vmem>>, vector<16x16xf32>
    %c0_1 = arith.constant 0 : index
    %c0_2 = arith.constant 0 : index
    %1 = vector.load %arg1[%c0_1, %c0_2] : memref<16x128xf32, #tpu.memory_space<vmem>>, vector<16x128xf32>
    %cst = arith.constant dense<0.000000e+00> : vector<16x128xf32>
    %2 = tpu.matmul %0, %1, %cst {dimension_numbers = #tpu.dot_dimension_numbers<[1], [0], [0], [1], [0, 0, 1, 1], [], []>} : vector<16x16xf32>, vector<16x128xf32>, vector<16x128xf32> -> vector<16x128xf32>
    %c0_3 = arith.constant 0 : index
    %c0_4 = arith.constant 0 : index
    %3 = vector.load %arg3[%c0_3, %c0_4] : memref<128x512xf32, #tpu.memory_space<vmem>>, vector<128x512xf32>
    %cst_5 = arith.constant dense<0.000000e+00> : vector<16x512xf32>
    %4 = tpu.matmul %2, %3, %cst_5 {dimension_numbers = #tpu.dot_dimension_numbers<[1], [0], [0], [1], [0, 0, 1, 1], [], []>} : vector<16x128xf32>, vector<128x512xf32>, vector<16x512xf32> -> vector<16x512xf32>
    %c0_6 = arith.constant 0 : index
    %c0_7 = arith.constant 0 : index
    %5 = vector.load %arg4[%c0_6, %c0_7] : memref<16x1xf32, #tpu.memory_space<vmem>>, vector<16x1xf32>
    %6 = vector.broadcast %5 : vector<16x1xf32> to vector<16x512xf32>
    %7 = arith.addf %4, %6 : vector<16x512xf32>
    %c0_8 = arith.constant 0 : index
    %c0_9 = arith.constant 0 : index
    %8 = vector.load %arg5[%c0_8, %c0_9] : memref<16x512xf32, #tpu.memory_space<vmem>>, vector<16x512xf32>
    %9 = arith.addf %7, %8 : vector<16x512xf32>
    %c0_10 = arith.constant 0 : index
    %c0_11 = arith.constant 0 : index
    %10 = vector.load %arg6[%c0_10, %c0_11] : memref<16x512xf32, #tpu.memory_space<vmem>>, vector<16x512xf32>
    tpu.vector_store %arg6[%c0_10, %c0_11], %9 {strides = array<i32>} : memref<16x512xf32, #tpu.memory_space<vmem>>, vector<16x512xf32>,
    return
  }
  func.func @transform_0(%arg0: i32) -> (i32, i32) {
    %c0_i32 = arith.constant 0 : i32
    %c0_i32_0 = arith.constant 0 : i32
    %c0_i32_1 = arith.constant 0 : i32
    return %c0_i32, %c0_i32_0 : i32, i32
  }
  func.func @transform_1(%arg0: i32) -> (i32, i32) {
    %c0_i32 = arith.constant 0 : i32
    %c0_i32_0 = arith.constant 0 : i32
    %c0_i32_1 = arith.constant 0 : i32
    return %c0_i32, %c0_i32_0 : i32, i32
  }
  func.func @transform_2(%arg0: i32) -> (i32, i32) {
    %c0_i32 = arith.constant 0 : i32
    %c0_i32_0 = arith.constant 0 : i32
    return %c0_i32, %arg0 : i32, i32
  }
  func.func @transform_3(%arg0: i32) -> (i32, i32) {
    %c0_i32 = arith.constant 0 : i32
    %c0_i32_0 = arith.constant 0 : i32
    %c0_i32_1 = arith.constant 0 : i32
    return %c0_i32, %c0_i32_0 : i32, i32
  }
  func.func @transform_4(%arg0: i32) -> (i32, i32) {
    %c0_i32 = arith.constant 0 : i32
    %c0_i32_0 = arith.constant 0 : i32
    return %c0_i32, %arg0 : i32, i32
  }
  func.func @transform_5(%arg0: i32) -> (i32, i32) {
    %c0_i32 = arith.constant 0 : i32
    %c0_i32_0 = arith.constant 0 : i32
    return %c0_i32, %arg0 : i32, i32
  }
}

</mosaic_0001>

<llo_original>
// kernel: tile.8
$region0: #{tile.8}
  #allocation0 [shape = 's32[1]{0}', space=sflag, size = 0x4, scoped, tag = 'scoped memory for tile.8']
  %s0 = inlined_call_operand.vmem [shape: f32[8], index: 0, kind: input, shape index: {}]
  %s1 = inlined_call_operand.vmem [shape: f32[2,8], index: 1, kind: output, shape index: {}]
  // Predicated region
  $region2: #{tile.8} parent=0 // pred_check
    _
  $region3: #{tile.8} parent=0 // pred_check_branch
    %3 = sbr.rel (0) target = $region5
  $region4: #{tile.8} parent=0 // pred_region
    _
  $region5: #{tile.8} parent=0 // pred_fallthru
    _
  %v4 = vld [vmem:[%s0] ss:$0 sm:$0xff]
  %5 = vst [vmem:[%s1] sm:$0x3] %v4

// kernel: tile.0
$region0: #{tile.0}
  %s0 = inlined_call_operand.vmem [shape: f32[2,8], index: 0, kind: input, shape index: {}]
  %s1 = inlined_call_operand.vmem [shape: f32[16,1], index: 1, kind: output, shape index: {}]
  $region1: #{tile.0} parent=0
    #allocation0 [shape = 'u8[4096]{0}', space=vmem, size = 0x1000, scoped, tag = 'scoped mem for input reshape']
    %s3 = ssub.s32 4, 1
    %v4 = vld [vmem:[%s0] sm:%s3]
    %5 = vst [vmem:[#allocation0] sm:%s3] %v4
    %v6 = vld [vmem:[#allocation0] sm:$0x3]
    %vm7 = vcmask 7168
    %8 = vst.msk [vmem:[%s1] ss:$8 sm:$0x3] %vm7, %v6
    %v9 = vld [vmem:[#allocation0] sm:$0x3]
    %10 = vrot.lane.b32.xlu0 %v9, 127
    %v11 = vpop.permute.xlu0 %10
    %vm12 = vcmask 7168
    %s13 = scalar_lea.vmem %s1, 1
    %14 = vst.msk [vmem:[%s13] ss:$8 sm:$0x3] %vm12, %v11
    %v15 = vld [vmem:[#allocation0] sm:$0x3]
    %16 = vrot.lane.b32.xlu0 %v15, 126
    %v17 = vpop.permute.xlu0 %16
    %vm18 = vcmask 7168
    %s19 = scalar_lea.vmem %s1, 2
    %20 = vst.msk [vmem:[%s19] ss:$8 sm:$0x3] %vm18, %v17
    %v21 = vld [vmem:[#allocation0] sm:$0x3]
    %22 = vrot.lane.b32.xlu0 %v21, 125
    %v23 = vpop.permute.xlu0 %22
    %vm24 = vcmask 7168
    %s25 = scalar_lea.vmem %s1, 3
    %26 = vst.msk [vmem:[%s25] ss:$8 sm:$0x3] %vm24, %v23
    %v27 = vld [vmem:[#allocation0] sm:$0x3]
    %28 = vrot.lane.b32.xlu0 %v27, 124
    %v29 = vpop.permute.xlu0 %28
    %vm30 = vcmask 7168
    %s31 = scalar_lea.vmem %s1, 4
    %32 = vst.msk [vmem:[%s31] ss:$8 sm:$0x3] %vm30, %v29
    %v33 = vld [vmem:[#allocation0] sm:$0x3]
    %34 = vrot.lane.b32.xlu0 %v33, 123
    %v35 = vpop.permute.xlu0 %34
    %vm36 = vcmask 7168
    %s37 = scalar_lea.vmem %s1, 5
    %38 = vst.msk [vmem:[%s37] ss:$8 sm:$0x3] %vm36, %v35
    %v39 = vld [vmem:[#allocation0] sm:$0x3]
    %40 = vrot.lane.b32.xlu0 %v39, 122
    %v41 = vpop.permute.xlu0 %40
    %vm42 = vcmask 7168
    %s43 = scalar_lea.vmem %s1, 6
    %44 = vst.msk [vmem:[%s43] ss:$8 sm:$0x3] %vm42, %v41
    %v45 = vld [vmem:[#allocation0] sm:$0x3]
    %46 = vrot.lane.b32.xlu0 %v45, 121
    %v47 = vpop.permute.xlu0 %46
    %vm48 = vcmask 7168
    %s49 = scalar_lea.vmem %s1, 7
    %50 = vst.msk [vmem:[%s49] ss:$8 sm:$0x3] %vm48, %v47

// kernel: _ring_upsampling_add_impl.1
$region0: #{_ring_upsampling_add_impl.1}
  #allocation0 [shape = 'u32[]', space=smem, size = 0x4, offset = 0x4, fixed_abs, tag = 'smem constant byte address 0x4 - core index']
  #allocation1 [shape = 'u32[72,128]{1,0:T(1,128)}', space=vmem, size = 0x9000, scoped, tag = 'internal scratch']
  %s0 = inlined_call_operand.vmem [shape: f32[16,128], index: 0, kind: input, shape index: {}]
  %s1 = inlined_call_operand.vmem [shape: f32[16,16], index: 1, kind: input, shape index: {}]
  %s2 = inlined_call_operand.hbm [shape: f32[128,512], index: 2, kind: input, shape index: {}]
  %s3 = inlined_call_operand.vmem [shape: f32[16,1], index: 3, kind: input, shape index: {}]
  %s4 = inlined_call_operand.vmem [shape: f32[16,512], index: 4, kind: input, shape index: {}]
  %s5 = inlined_call_operand.vmem [shape: f32[16,512], index: 5, kind: output, shape index: {}]
  %s6 = sld [smem:[#allocation0]]
  $region34: #{_ring_upsampling_add_impl.1} parent=0
    _
  %s8 = ssub.s32 1, %s6
  %s9 = scalar_select 0, %s8, %s6
  $region1: #{_ring_upsampling_add_impl.1} parent=0
    #allocation2 [shape = 'u8[262144]{0}', space=vmem, size = 0x40000, scoped, tag = 'input window, operand 2, single buffered']
    #allocation3 [shape = 's32[1]{0}', space=sflag, size = 0x4, scoped, tag = 'scoped memory for _ring_upsampling_add_impl.1']
    %10 = vsyncpa [#allocation3], 0
    // Predicated region
    $region2: #{_ring_upsampling_add_impl.1} parent=1 // pred_check
      _
    $region3: #{_ring_upsampling_add_impl.1} parent=1 // pred_check_branch
      %12 = sbr.rel (0) target = $region5
    $region4: #{_ring_upsampling_add_impl.1} parent=1 // pred_region
      _
    $region5: #{_ring_upsampling_add_impl.1} parent=1 // pred_fallthru
      _
    // Predicated region
    $region6: #{_ring_upsampling_add_impl.1} parent=1 // pred_check
      _
    $region7: #{_ring_upsampling_add_impl.1} parent=1 // pred_check_branch
      %14 = sbr.rel (0) target = $region9
    $region8: #{_ring_upsampling_add_impl.1} parent=1 // pred_region
      _
    $region9: #{_ring_upsampling_add_impl.1} parent=1 // pred_fallthru
      _
    // Predicated region
    $region10: #{_ring_upsampling_add_impl.1} parent=1 // pred_check
      _
    $region11: #{_ring_upsampling_add_impl.1} parent=1 // pred_check_branch
      %16 = sbr.rel (0) target = $region13
    $region12: #{_ring_upsampling_add_impl.1} parent=1 // pred_region
      %18 = vsyncadd [#allocation3], 0
      %s19 = sshll.u32 %s2, 4
      %s20 = int_to_ptr.hbm [resolvable:$true] %s19
      %s21 = sshll.u32 [#allocation2], 4
      %s22 = int_to_ptr.vmem [resolvable:$true] %s21
      %27 = dma.hbm_to_vmem [thread:$0]  %s20, 8192, %s22, [#allocation3], 512, 512, 32
    $region13: #{_ring_upsampling_add_impl.1} parent=1 // pred_fallthru
      _
    // Predicated region
    $region14: #{_ring_upsampling_add_impl.1} parent=1 // pred_check
      _
    $region15: #{_ring_upsampling_add_impl.1} parent=1 // pred_check_branch
      %29 = sbr.rel (0) target = $region17
    $region16: #{_ring_upsampling_add_impl.1} parent=1 // pred_region
      _
    $region17: #{_ring_upsampling_add_impl.1} parent=1 // pred_fallthru
      _
    // Predicated region
    $region18: #{_ring_upsampling_add_impl.1} parent=1 // pred_check
      _
    $region19: #{_ring_upsampling_add_impl.1} parent=1 // pred_check_branch
      %31 = sbr.rel (0) target = $region21
    $region20: #{_ring_upsampling_add_impl.1} parent=1 // pred_region
      _
    $region21: #{_ring_upsampling_add_impl.1} parent=1 // pred_fallthru
      _
    // Predicated region
    $region22: #{_ring_upsampling_add_impl.1} parent=1 // pred_check
      _
    $region23: #{_ring_upsampling_add_impl.1} parent=1 // pred_check_branch
      %33 = sbr.rel (0) target = $region25
    $region24: #{_ring_upsampling_add_impl.1} parent=1 // pred_region
      %35 = dma.done [#allocation3], 8192
    $region25: #{_ring_upsampling_add_impl.1} parent=1 // pred_fallthru
      _
    %v36 = vld [vmem:[%s1] sm:$0xff]
    %v37 = vld [vmem:[%s1 + $0x8] sm:$0xff]
    %v38 = vld [vmem:[%s0] sm:$0xff]
    %v39 = vld [vmem:[%s0 + $0x8] sm:$0xff]
    %vm40 = vcmask 130048
    %v42 = vsel %vm40, %v36, 0
    %v45 = vsel %vm40, %v37, 0
    %47 = vmatpush.msra.mxu0 0.0
    %48 = vmatpush.msra.mxu0 0.0
    %49 = vmatpush.msra.mxu0 0.0
    %50 = vmatpush.msra.mxu0 0.0
    %51 = vmatpush.msra.mxu0 0.0
    %52 = vmatpush.msra.mxu0 0.0
    %53 = vmatpush.msra.mxu0 0.0
    %54 = vmatpush.msra.mxu0 0.0
    %55 = vmatpush.msra.mxu0 0.0
    %56 = vmatpush.msra.mxu0 0.0
    %57 = vmatpush.msra.mxu0 0.0
    %58 = vmatpush.msra.mxu0 0.0
    %59 = vmatpush.msra.mxu0 0.0
    %60 = vmatpush.msra.mxu0 0.0
    %61 = vmatpush.msra.mxu0 %v39
    %62 = vmatpush.msra.mxu0 %v38
    %63 = vmatmul.f32.gmra.mxu0 %v42
    %v64 = vpop.f32.mrf.mxu0
    %v65 = vadd.f32 0.0, %v64
    %66 = vmatmul.f32.gmra.mxu0 %v45
    %v67 = vpop.f32.mrf.mxu0
    %v68 = vadd.f32 0.0, %v67
    %69 = vdwg.mxu0
    %v70 = vld [vmem:[#allocation2] sm:$0xff]
    %v71 = vld [vmem:[#allocation2 + $0x8] sm:$0xff]
    %v72 = vld [vmem:[#allocation2 + $0x10] sm:$0xff]
    %v73 = vld [vmem:[#allocation2 + $0x18] sm:$0xff]
    %v74 = vld [vmem:[#allocation2 + $0x20] sm:$0xff]
    %v75 = vld [vmem:[#allocation2 + $0x28] sm:$0xff]
    %v76 = vld [vmem:[#allocation2 + $0x30] sm:$0xff]
    %v77 = vld [vmem:[#allocation2 + $0x38] sm:$0xff]
    %v78 = vld [vmem:[#allocation2 + $0x40] sm:$0xff]
    %v79 = vld [vmem:[#allocation2 + $0x48] sm:$0xff]
    %v80 = vld [vmem:[#allocation2 + $0x50] sm:$0xff]
    %v81 = vld [vmem:[#allocation2 + $0x58] sm:$0xff]
    %v82 = vld [vmem:[#allocation2 + $0x60] sm:$0xff]
    %v83 = vld [vmem:[#allocation2 + $0x68] sm:$0xff]
    %v84 = vld [vmem:[#allocation2 + $0x70] sm:$0xff]
    %v85 = vld [vmem:[#allocation2 + $0x78] sm:$0xff]
    %v86 = vld [vmem:[#allocation2 + $0x80] sm:$0xff]
    %v87 = vld [vmem:[#allocation2 + $0x88] sm:$0xff]
    %v88 = vld [vmem:[#allocation2 + $0x90] sm:$0xff]
    %v89 = vld [vmem:[#allocation2 + $0x98] sm:$0xff]
    %v90 = vld [vmem:[#allocation2 + $0xa0] sm:$0xff]
    %v91 = vld [vmem:[#allocation2 + $0xa8] sm:$0xff]
    %v92 = vld [vmem:[#allocation2 + $0xb0] sm:$0xff]
    %v93 = vld [vmem:[#allocation2 + $0xb8] sm:$0xff]
    %v94 = vld [vmem:[#allocation2 + $0xc0] sm:$0xff]
    %v95 = vld [vmem:[#allocation2 + $0xc8] sm:$0xff]
    %v96 = vld [vmem:[#allocation2 + $0xd0] sm:$0xff]
    %v97 = vld [vmem:[#allocation2 + $0xd8] sm:$0xff]
    %v98 = vld [vmem:[#allocation2 + $0xe0] sm:$0xff]
    %v99 = vld [vmem:[#allocation2 + $0xe8] sm:$0xff]
    %v100 = vld [vmem:[#allocation2 + $0xf0] sm:$0xff]
    %v101 = vld [vmem:[#allocation2 + $0xf8] sm:$0xff]
    %v102 = vld [vmem:[#allocation2 + $0x100] sm:$0xff]
    %v103 = vld [vmem:[#allocation2 + $0x108] sm:$0xff]
    %v104 = vld [vmem:[#allocation2 + $0x110] sm:$0xff]
    %v105 = vld [vmem:[#allocation2 + $0x118] sm:$0xff]
    %v106 = vld [vmem:[#allocation2 + $0x120] sm:$0xff]
    %v107 = vld [vmem:[#allocation2 + $0x128] sm:$0xff]
    %v108 = vld [vmem:[#allocation2 + $0x130] sm:$0xff]
    %v109 = vld [vmem:[#allocation2 + $0x138] sm:$0xff]
    %v110 = vld [vmem:[#allocation2 + $0x140] sm:$0xff]
    %v111 = vld [vmem:[#allocation2 + $0x148] sm:$0xff]
    %v112 = vld [vmem:[#allocation2 + $0x150] sm:$0xff]
    %v113 = vld [vmem:[#allocation2 + $0x158] sm:$0xff]
    %v114 = vld [vmem:[#allocation2 + $0x160] sm:$0xff]
    %v115 = vld [vmem:[#allocation2 + $0x168] sm:$0xff]
    %v116 = vld [vmem:[#allocation2 + $0x170] sm:$0xff]
    %v117 = vld [vmem:[#allocation2 + $0x178] sm:$0xff]
    %v118 = vld [vmem:[#allocation2 + $0x180] sm:$0xff]
    %v119 = vld [vmem:[#allocation2 + $0x188] sm:$0xff]
    %v120 = vld [vmem:[#allocation2 + $0x190] sm:$0xff]
    %v121 = vld [vmem:[#allocation2 + $0x198] sm:$0xff]
    %v122 = vld [vmem:[#allocation2 + $0x1a0] sm:$0xff]
    %v123 = vld [vmem:[#allocation2 + $0x1a8] sm:$0xff]
    %v124 = vld [vmem:[#allocation2 + $0x1b0] sm:$0xff]
    %v125 = vld [vmem:[#allocation2 + $0x1b8] sm:$0xff]
    %v126 = vld [vmem:[#allocation2 + $0x1c0] sm:$0xff]
    %v127 = vld [vmem:[#allocation2 + $0x1c8] sm:$0xff]
    %v128 = vld [vmem:[#allocation2 + $0x1d0] sm:$0xff]
    %v129 = vld [vmem:[#allocation2 + $0x1d8] sm:$0xff]
    %v130 = vld [vmem:[#allocation2 + $0x1e0] sm:$0xff]
    %v131 = vld [vmem:[#allocation2 + $0x1e8] sm:$0xff]
    %v132 = vld [vmem:[#allocation2 + $0x1f0] sm:$0xff]
    %v133 = vld [vmem:[#allocation2 + $0x1f8] sm:$0xff]
    %v134 = vld [vmem:[%s3] sm:$0xff]
    %v135 = vld [vmem:[%s3 + $0x8] sm:$0xff]
    %137 = vset.pattern.permute.xlu0 0
    %138 = vperm.xlu0 %137, %v134
    %v139 = vpop.permute.xlu0 %138
    %142 = vset.pattern.permute.xlu0 0
    %143 = vperm.xlu0 %142, %v135
    %v144 = vpop.permute.xlu0 %143
    %146 = vmatpush.msra.mxu0 %v130
    %147 = vmatpush.msra.mxu0 %v126
    %148 = vmatpush.msra.mxu0 %v122
    %149 = vmatpush.msra.mxu0 %v118
    %150 = vmatpush.msra.mxu0 %v114
    %151 = vmatpush.msra.mxu0 %v110
    %152 = vmatpush.msra.mxu0 %v106
    %153 = vmatpush.msra.mxu0 %v102
    %154 = vmatpush.msra.mxu0 %v98
    %155 = vmatpush.msra.mxu0 %v94
    %156 = vmatpush.msra.mxu0 %v90
    %157 = vmatpush.msra.mxu0 %v86
    %158 = vmatpush.msra.mxu0 %v82
    %159 = vmatpush.msra.mxu0 %v78
    %160 = vmatpush.msra.mxu0 %v74
    %161 = vmatpush.msra.mxu0 %v70
    %162 = vmatmul.f32.gmra.mxu0 %v65
    %v163 = vpop.f32.mrf.mxu0
    %v164 = vadd.f32 %v139, %v163
    %165 = vmatmul.f32.gmra.mxu0 %v68
    %v166 = vpop.f32.mrf.mxu0
    %v167 = vadd.f32 %v144, %v166
    %168 = vdwg.mxu0
    %169 = vmatpush.msra.mxu0 %v131
    %170 = vmatpush.msra.mxu0 %v127
    %171 = vmatpush.msra.mxu0 %v123
    %172 = vmatpush.msra.mxu0 %v119
    %173 = vmatpush.msra.mxu0 %v115
    %174 = vmatpush.msra.mxu0 %v111
    %175 = vmatpush.msra.mxu0 %v107
    %176 = vmatpush.msra.mxu0 %v103
    %177 = vmatpush.msra.mxu0 %v99
    %178 = vmatpush.msra.mxu0 %v95
    %179 = vmatpush.msra.mxu0 %v91
    %180 = vmatpush.msra.mxu0 %v87
    %181 = vmatpush.msra.mxu0 %v83
    %182 = vmatpush.msra.mxu0 %v79
    %183 = vmatpush.msra.mxu0 %v75
    %184 = vmatpush.msra.mxu0 %v71
    %185 = vmatmul.f32.gmra.mxu0 %v65
    %v186 = vpop.f32.mrf.mxu0
    %v187 = vadd.f32 %v139, %v186
    %188 = vmatmul.f32.gmra.mxu0 %v68
    %v189 = vpop.f32.mrf.mxu0
    %v190 = vadd.f32 %v144, %v189
    %191 = vdwg.mxu0
    %192 = vmatpush.msra.mxu0 %v132
    %193 = vmatpush.msra.mxu0 %v128
    %194 = vmatpush.msra.mxu0 %v124
    %195 = vmatpush.msra.mxu0 %v120
    %196 = vmatpush.msra.mxu0 %v116
    %197 = vmatpush.msra.mxu0 %v112
    %198 = vmatpush.msra.mxu0 %v108
    %199 = vmatpush.msra.mxu0 %v104
    %200 = vmatpush.msra.mxu0 %v100
    %201 = vmatpush.msra.mxu0 %v96
    %202 = vmatpush.msra.mxu0 %v92
    %203 = vmatpush.msra.mxu0 %v88
    %204 = vmatpush.msra.mxu0 %v84
    %205 = vmatpush.msra.mxu0 %v80
    %206 = vmatpush.msra.mxu0 %v76
    %207 = vmatpush.msra.mxu0 %v72
    %208 = vmatmul.f32.gmra.mxu0 %v65
    %v209 = vpop.f32.mrf.mxu0
    %v210 = vadd.f32 %v139, %v209
    %211 = vmatmul.f32.gmra.mxu0 %v68
    %v212 = vpop.f32.mrf.mxu0
    %v213 = vadd.f32 %v144, %v212
    %214 = vdwg.mxu0
    %215 = vmatpush.msra.mxu0 %v133
    %216 = vmatpush.msra.mxu0 %v129
    %217 = vmatpush.msra.mxu0 %v125
    %218 = vmatpush.msra.mxu0 %v121
    %219 = vmatpush.msra.mxu0 %v117
    %220 = vmatpush.msra.mxu0 %v113
    %221 = vmatpush.msra.mxu0 %v109
    %222 = vmatpush.msra.mxu0 %v105
    %223 = vmatpush.msra.mxu0 %v101
    %224 = vmatpush.msra.mxu0 %v97
    %225 = vmatpush.msra.mxu0 %v93
    %226 = vmatpush.msra.mxu0 %v89
    %227 = vmatpush.msra.mxu0 %v85
    %228 = vmatpush.msra.mxu0 %v81
    %229 = vmatpush.msra.mxu0 %v77
    %230 = vmatpush.msra.mxu0 %v73
    %231 = vmatmul.f32.gmra.mxu0 %v65
    %v232 = vpop.f32.mrf.mxu0
    %v233 = vadd.f32 %v139, %v232
    %234 = vmatmul.f32.gmra.mxu0 %v68
    %v235 = vpop.f32.mrf.mxu0
    %v236 = vadd.f32 %v144, %v235
    %237 = vdwg.mxu0
    %v238 = vld [vmem:[%s4] sm:$0xff]
    %v239 = vld [vmem:[%s4 + $0x8] sm:$0xff]
    %v240 = vld [vmem:[%s4 + $0x10] sm:$0xff]
    %v241 = vld [vmem:[%s4 + $0x18] sm:$0xff]
    %v242 = vld [vmem:[%s4 + $0x20] sm:$0xff]
    %v243 = vld [vmem:[%s4 + $0x28] sm:$0xff]
    %v244 = vld [vmem:[%s4 + $0x30] sm:$0xff]
    %v245 = vld [vmem:[%s4 + $0x38] sm:$0xff]
    %v246 = vadd.f32 %v164, %v238
    %v247 = vadd.f32 %v187, %v239
    %v248 = vadd.f32 %v210, %v240
    %v249 = vadd.f32 %v233, %v241
    %v250 = vadd.f32 %v167, %v242
    %v251 = vadd.f32 %v190, %v243
    %v252 = vadd.f32 %v213, %v244
    %v253 = vadd.f32 %v236, %v245
    %254 = vst [vmem:[%s5] sm:$0xff] %v246
    %255 = vst [vmem:[%s5 + $0x8] sm:$0xff] %v247
    %256 = vst [vmem:[%s5 + $0x10] sm:$0xff] %v248
    %257 = vst [vmem:[%s5 + $0x18] sm:$0xff] %v249
    %258 = vst [vmem:[%s5 + $0x20] sm:$0xff] %v250
    %259 = vst [vmem:[%s5 + $0x28] sm:$0xff] %v251
    %260 = vst [vmem:[%s5 + $0x30] sm:$0xff] %v252
    %261 = vst [vmem:[%s5 + $0x38] sm:$0xff] %v253
    // Predicated region
    $region26: #{_ring_upsampling_add_impl.1} parent=1 // pred_check
      _
    $region27: #{_ring_upsampling_add_impl.1} parent=1 // pred_check_branch
      %263 = sbr.rel (0) target = $region29
    $region28: #{_ring_upsampling_add_impl.1} parent=1 // pred_region
      _
    $region29: #{_ring_upsampling_add_impl.1} parent=1 // pred_fallthru
      _
    // Predicated region
    $region30: #{_ring_upsampling_add_impl.1} parent=1 // pred_check
      _
    $region31: #{_ring_upsampling_add_impl.1} parent=1 // pred_check_branch
      %265 = sbr.rel (0) target = $region33
    $region32: #{_ring_upsampling_add_impl.1} parent=1 // pred_region
      _
    $region33: #{_ring_upsampling_add_impl.1} parent=1 // pred_fallthru
      _
    %266 = vsyncpa [#allocation3], 1

</llo_original>
